<compile_context>
chip_gen: v5e
topology: v5e:2x2
jax: 0.10.0
libtpu: 0.0.40
codegen_flags: <defaults>
</compile_context>

<pallas_src>
import math

import jax
import jax.numpy as jnp
from jax.experimental import pallas as pl
from jax.experimental.pallas import tpu as pltpu


def _make_kernel(compute_dtype):
    def dyt_kernel(alpha_ref, w_ref, b_ref, x_ref, o_ref):
        # alpha_ref: SMEM scalar (1,) f32
        # w_ref, b_ref: (1, Fw) VMEM tiles (broadcast along rows)
        # x_ref, o_ref: (tm, Fw) VMEM tiles
        a = alpha_ref[0].astype(compute_dtype)
        x = x_ref[...].astype(compute_dtype)
        w = w_ref[...].astype(compute_dtype)
        b = b_ref[...].astype(compute_dtype)
        y = jnp.tanh(a * x)                    # EUP tanh, VPU mul
        o_ref[...] = (y * w + b).astype(o_ref.dtype)
    return dyt_kernel


def _vmem_cap_bytes():
    try:
        info = pltpu.get_tpu_info()
        return int(0.75 * int(info.vmem_capacity_bytes))
    except Exception:
        # Conservative default = 0.75 * 64 MiB (v7x per-TC VMEM); safe everywhere.
        return int(0.75 * (64 << 20))


def _pick_tile_rows(Mf, Fw, itemsize, target_block_bytes):
    """Pick row-tile tm (folded rows) and block count for grid=(n_blocks,)."""
    if Mf <= 8:
        return Mf, 1                            # single block, full rows
    floor8 = (Mf // 8) * 8
    tm = (target_block_bytes // (Fw * itemsize)) // 8 * 8
    tm = max(8, min(tm, floor8))
    # Ensure >= 2 blocks so v7x can shard the parallel axis across both TCs.
    if pl.cdiv(Mf, tm) < 2:
        half = (((Mf + 1) // 2) + 7) // 8 * 8
        tm = max(8, min(half, floor8))
    return tm, pl.cdiv(Mf, tm)


def dyt_forward(x, alpha, weight, bias, *, target_block_bytes=None):
    """x: (..., F).  Returns tanh(alpha*x)*weight + bias, same shape/dtype."""
    orig_shape = x.shape
    F = orig_shape[-1]
    M = 1
    for d in orig_shape[:-1]:
        M *= d
    if M == 0 or F == 0:
        return x                                # empty input: nothing to do

    itemsize = jnp.dtype(x.dtype).itemsize
    compute_dtype = jnp.bfloat16 if x.dtype == jnp.bfloat16 else jnp.float32

    vmem_cap = _vmem_cap_bytes()
    if target_block_bytes is None:
        # ~8 MiB on v7x (48 MiB cap), ~16 MiB on v5e/v6e (96 MiB cap).
        target_block_bytes = min(16 << 20, vmem_cap // 6)

    # Lane-dense folding: fold k rows so the last dim is a multiple of 128.
    k = 128 // math.gcd(F, 128)
    Fw = k * F

    x2 = x.reshape(M, F)
    alpha1 = alpha.reshape(1).astype(jnp.float32)
    wf = jnp.tile(weight.reshape(1, F), (1, k))
    bf = jnp.tile(bias.reshape(1, F), (1, k))

    rem = M % k                                 # leftover rows that can't fold
    M_main = M - rem

    pieces = []
    if M_main > 0:
        Mf = M_main // k
        xf = (x2 if rem == 0 else x2[:M_main]).reshape(Mf, Fw)

        tm, n_blocks = _pick_tile_rows(Mf, Fw, itemsize, target_block_bytes)
        block_bytes = tm * Fw * itemsize
        # 2 in + 2 out double-buffers + params + headroom.
        need = int(4 * block_bytes * 1.3) + 2 * Fw * 4 + (2 << 20)
        vmem_bytes = min(max(need, 8 << 20), vmem_cap)

        cost = pl.CostEstimate(
            flops=int(4 * M_main * F),
            transcendentals=int(M_main * F),
            bytes_accessed=int(2 * M_main * F * itemsize),
        )

        out_main = pl.pallas_call(
            _make_kernel(compute_dtype),
            out_shape=jax.ShapeDtypeStruct((Mf, Fw), x.dtype),
            grid=(n_blocks,),
            in_specs=[
                pl.BlockSpec(memory_space=pltpu.SMEM),        # alpha scalar
                pl.BlockSpec((1, Fw), lambda i: (0, 0)),      # weight (resident)
                pl.BlockSpec((1, Fw), lambda i: (0, 0)),      # bias (resident)
                pl.BlockSpec((tm, Fw), lambda i: (i, 0)),     # x tile
            ],
            out_specs=pl.BlockSpec((tm, Fw), lambda i: (i, 0)),
            compiler_params=pltpu.CompilerParams(
                dimension_semantics=("parallel",),
                vmem_limit_bytes=vmem_bytes),
            cost_estimate=cost,
        )(alpha1, wf, bf, xf)
        pieces.append(out_main.reshape(M_main, F))

    if rem > 0:
        # < k (< 128) leftover rows: negligible work, plain JAX avoids any
        # full-array padding copy.
        xt = x2[M_main:].astype(jnp.float32)
        out_tail = (jnp.tanh(alpha1[0] * xt) * weight.astype(jnp.float32)
                    + bias.astype(jnp.float32)).astype(x.dtype)
        pieces.append(out_tail)

    out = pieces[0] if len(pieces) == 1 else jnp.concatenate(pieces, axis=0)
    return out.reshape(orig_shape)


if __name__ == "__main__":
    B, S, F = 2, 8, 32  # batch, seq, num_features (hidden)
    key = jax.random.PRNGKey(0)
    x = jax.random.normal(key, (B, S, F), dtype=jnp.float32)

    # Deterministic parameter init matching DyT.__init__ (alpha_init=0.5):
    alpha = jnp.ones((1,), dtype=jnp.float32) * 0.5
    weight = jnp.ones((F,), dtype=jnp.float32)
    bias = jnp.zeros((F,), dtype=jnp.float32)

    y = dyt_forward(x, alpha, weight, bias)
    y = jax.block_until_ready(y)

    # Reference check (plain JAX).
    ref = jnp.tanh(alpha[0] * x) * weight + bias
    assert y.shape == ref.shape, "shape mismatch vs reference"
    assert jnp.allclose(y, ref, atol=1e-6, rtol=1e-6), "mismatch vs reference"

    # Also exercise a shape where M % k != 0 (tail path) and F % 128 == 0.
    x3 = jax.random.normal(key, (3, 7, 96), dtype=jnp.float32)   # k=4, M=21
    w3 = jnp.linspace(0.5, 1.5, 96, dtype=jnp.float32)
    b3 = jnp.linspace(-0.1, 0.1, 96, dtype=jnp.float32)
    y3 = jax.block_until_ready(dyt_forward(x3, alpha, w3, b3))
    ref3 = jnp.tanh(alpha[0] * x3) * w3 + b3
    assert jnp.allclose(y3, ref3, atol=1e-6, rtol=1e-6), "mismatch (tail path)"

    x4 = jax.random.normal(key, (4, 5, 128), dtype=jnp.float32)  # k=1, ragged
    w4 = jnp.ones((128,), dtype=jnp.float32) * 2.0
    b4 = jnp.ones((128,), dtype=jnp.float32) * 0.25
    y4 = jax.block_until_ready(dyt_forward(x4, alpha, w4, b4))
    ref4 = jnp.tanh(alpha[0] * x4) * w4 + b4
    assert jnp.allclose(y4, ref4, atol=1e-6, rtol=1e-6), "mismatch (k=1 path)"

    print("KERNEL_OK")
</pallas_src>

<mosaic_0001>
module attributes {stable_mosaic.version = 11 : i64} {
  func.func @dyt_kernel(%arg0: i32, %arg1: memref<1xf32, #tpu.memory_space<smem>>, %arg2: memref<1x128xf32, #tpu.memory_space<vmem>>, %arg3: memref<1x128xf32, #tpu.memory_space<vmem>>, %arg4: memref<4x128xf32, #tpu.memory_space<vmem>>, %arg5: memref<4x128xf32, #tpu.memory_space<vmem>>) attributes {dimension_semantics = [#tpu.dimension_semantics<parallel>], iteration_bounds = array<i64: 1>, scalar_prefetch = 0 : i64, scratch_operands = 0 : i64, tpu.core_type = #tpu.core_type<tc>, window_params = [{transform_indices = @transform_0, window_bounds = array<i64: 1>}, {pipeline_mode = #tpu.pipeline_mode<synchronous>, transform_indices = @transform_1, window_bounds = array<i64: 1, 128>}, {pipeline_mode = #tpu.pipeline_mode<synchronous>, transform_indices = @transform_2, window_bounds = array<i64: 1, 128>}, {transform_indices = @transform_3, window_bounds = array<i64: 4, 128>}, {transform_indices = @transform_4, window_bounds = array<i64: 4, 128>}]} {
    %c0 = arith.constant 0 : index
    %0 = memref.load %arg1[%c0] : memref<1xf32, #tpu.memory_space<smem>>
    %c0_0 = arith.constant 0 : index
    %c0_1 = arith.constant 0 : index
    %1 = vector.load %arg4[%c0_0, %c0_1] : memref<4x128xf32, #tpu.memory_space<vmem>>, vector<4x128xf32>
    %c0_2 = arith.constant 0 : index
    %c0_3 = arith.constant 0 : index
    %2 = vector.load %arg2[%c0_2, %c0_3] : memref<1x128xf32, #tpu.memory_space<vmem>>, vector<1x128xf32>
    %c0_4 = arith.constant 0 : index
    %c0_5 = arith.constant 0 : index
    %3 = vector.load %arg3[%c0_4, %c0_5] : memref<1x128xf32, #tpu.memory_space<vmem>>, vector<1x128xf32>
    %4 = vector.broadcast %0 : f32 to vector<4x128xf32>
    %5 = arith.mulf %4, %1 : vector<4x128xf32>
    %6 = math.tanh %5 : vector<4x128xf32>
    %7 = vector.broadcast %2 : vector<1x128xf32> to vector<4x128xf32>
    %8 = arith.mulf %6, %7 : vector<4x128xf32>
    %9 = vector.broadcast %3 : vector<1x128xf32> to vector<4x128xf32>
    %10 = arith.addf %8, %9 : vector<4x128xf32>
    %c0_6 = arith.constant 0 : index
    %c0_7 = arith.constant 0 : index
    %11 = vector.load %arg5[%c0_6, %c0_7] : memref<4x128xf32, #tpu.memory_space<vmem>>, vector<4x128xf32>
    tpu.vector_store %arg5[%c0_6, %c0_7], %10 {strides = array<i32>} : memref<4x128xf32, #tpu.memory_space<vmem>>, vector<4x128xf32>,
    return
  }
  func.func @transform_0(%arg0: i32) -> i32 {
    %c0_i32 = arith.constant 0 : i32
    %c0_i32_0 = arith.constant 0 : i32
    return %c0_i32 : i32
  }
  func.func @transform_1(%arg0: i32) -> (i32, i32) {
    %c0_i32 = arith.constant 0 : i32
    %c0_i32_0 = arith.constant 0 : i32
    %c0_i32_1 = arith.constant 0 : i32
    return %c0_i32, %c0_i32_0 : i32, i32
  }
  func.func @transform_2(%arg0: i32) -> (i32, i32) {
    %c0_i32 = arith.constant 0 : i32
    %c0_i32_0 = arith.constant 0 : i32
    %c0_i32_1 = arith.constant 0 : i32
    return %c0_i32, %c0_i32_0 : i32, i32
  }
  func.func @transform_3(%arg0: i32) -> (i32, i32) {
    %c0_i32 = arith.constant 0 : i32
    %c0_i32_0 = arith.constant 0 : i32
    return %arg0, %c0_i32 : i32, i32
  }
  func.func @transform_4(%arg0: i32) -> (i32, i32) {
    %c0_i32 = arith.constant 0 : i32
    %c0_i32_0 = arith.constant 0 : i32
    return %arg0, %c0_i32 : i32, i32
  }
}

</mosaic_0001>

<llo_original>
// kernel: tpu_custom_call.1
$region0: #{tpu_custom_call.1}
  #allocation0 [shape = 'u32[]', space=smem, size = 0x4, offset = 0x4, fixed_abs, tag = 'smem constant byte address 0x4 - core index']
  #allocation1 [shape = 'u32[72,128]{1,0:T(1,128)}', space=vmem, size = 0x9000, scoped, tag = 'internal scratch']
  #allocation2 [shape = 'f32[1]{0:T(128)S(6)}', space=smem, size = 0x200, scoped, tag = 'scoped memory for tpu_custom_call.1']
  %s0 = inlined_call_operand.<no memory space> [shape: f32[1], index: 0, kind: input, shape index: {}]
  %s1 = inlined_call_operand.vmem [shape: f32[1,128], index: 1, kind: input, shape index: {}]
  %s2 = inlined_call_operand.vmem [shape: f32[1,128], index: 2, kind: input, shape index: {}]
  %s3 = inlined_call_operand.hbm [shape: f32[4,128], index: 3, kind: input, shape index: {}]
  %s4 = inlined_call_operand.hbm [shape: f32[4,128], index: 4, kind: output, shape index: {}]
  %s5 = sld [smem:[#allocation0]]
  $region30: #{tpu_custom_call.1} parent=0
    _
  %s7 = ssub.s32 1, %s5
  %s8 = scalar_select 0, %s7, %s5
  %9 = sst [smem:[#allocation2]] %s0
  $region1: #{tpu_custom_call.1} parent=0
    #allocation3 [shape = 'u8[2048]{0}', space=vmem, size = 0x800, scoped, tag = 'input window, operand 3, single buffered']
    #allocation4 [shape = 's32[1]{0}', space=sflag, size = 0x4, scoped, tag = 'scoped memory for tpu_custom_call.1']
    #allocation5 [shape = 's32[1]{0}', space=sflag, size = 0x4, scoped, tag = 'scoped memory for tpu_custom_call.1']
    #allocation6 [shape = 'u8[2048]{0}', space=vmem, size = 0x800, scoped, tag = 'output window, operand 0, single buffered']
    %10 = vsyncpa [#allocation4], 0
    %11 = vsyncpa [#allocation5], 0
    // Predicated region
    $region2: #{tpu_custom_call.1} parent=1 // pred_check
      _
    $region3: #{tpu_custom_call.1} parent=1 // pred_check_branch
      %13 = sbr.rel (0) target = $region5
    $region4: #{tpu_custom_call.1} parent=1 // pred_region
      _
    $region5: #{tpu_custom_call.1} parent=1 // pred_fallthru
      _
    // Predicated region
    $region6: #{tpu_custom_call.1} parent=1 // pred_check
      _
    $region7: #{tpu_custom_call.1} parent=1 // pred_check_branch
      %15 = sbr.rel (0) target = $region9
    $region8: #{tpu_custom_call.1} parent=1 // pred_region
      _
    $region9: #{tpu_custom_call.1} parent=1 // pred_fallthru
      _
    // Predicated region
    $region10: #{tpu_custom_call.1} parent=1 // pred_check
      _
    $region11: #{tpu_custom_call.1} parent=1 // pred_check_branch
      %17 = sbr.rel (0) target = $region13
    $region12: #{tpu_custom_call.1} parent=1 // pred_region
      _
    $region13: #{tpu_custom_call.1} parent=1 // pred_fallthru
      _
    // Predicated region
    $region14: #{tpu_custom_call.1} parent=1 // pred_check
      _
    $region15: #{tpu_custom_call.1} parent=1 // pred_check_branch
      %19 = sbr.rel (0) target = $region17
    $region16: #{tpu_custom_call.1} parent=1 // pred_region
      %21 = vsyncadd [#allocation4], 0
      %s23 = sshll.u32 %s3, 4
      %s24 = int_to_ptr.hbm [resolvable:$true] %s23
      %s25 = sshll.u32 [#allocation3], 4
      %s26 = int_to_ptr.vmem [resolvable:$true] %s25
      %28 = dma.hbm_to_vmem [thread:$0]  %s24, 64, %s26, [#allocation4]
    $region17: #{tpu_custom_call.1} parent=1 // pred_fallthru
      _
    // Predicated region
    $region18: #{tpu_custom_call.1} parent=1 // pred_check
      _
    $region19: #{tpu_custom_call.1} parent=1 // pred_check_branch
      %30 = sbr.rel (0) target = $region21
    $region20: #{tpu_custom_call.1} parent=1 // pred_region
      %32 = dma.done [#allocation4], 64
    $region21: #{tpu_custom_call.1} parent=1 // pred_fallthru
      _
    %s33 = sld [smem:[#allocation2]]
    %v34 = vld [vmem:[#allocation3] sm:$0xf]
    %v35 = vld [vmem:[%s1] sm:$0x1]
    %v36 = vld [vmem:[%s2] sm:$0x1]
    %v37 = vstv %s33
    %v38 = vmul.f32 %v37, %v34
    %v39 = vtanh.pop %v38
    %v41 = vperm.slane %v35, 0
    %v43 = vmul.f32 %v39, %v41
    %v45 = vperm.slane %v36, 0
    %v47 = vadd.f32 %v43, %v45
    %48 = vst [vmem:[#allocation6] sm:$0xf] %v47
    // Predicated region
    $region22: #{tpu_custom_call.1} parent=1 // pred_check
      _
    $region23: #{tpu_custom_call.1} parent=1 // pred_check_branch
      %50 = sbr.rel (0) target = $region25
    $region24: #{tpu_custom_call.1} parent=1 // pred_region
      %52 = vsyncadd [#allocation5], 0
      %s54 = sshll.u32 [#allocation6], 4
      %s55 = int_to_ptr.vmem [resolvable:$true] %s54
      %s56 = sshll.u32 %s4, 4
      %s57 = int_to_ptr.hbm [resolvable:$true] %s56
      %59 = dma.vmem_to_hbm [thread:$0]  %s55, 64, %s57, [#allocation5]
    $region25: #{tpu_custom_call.1} parent=1 // pred_fallthru
      _
    // Predicated region
    $region26: #{tpu_custom_call.1} parent=1 // pred_check
      _
    $region27: #{tpu_custom_call.1} parent=1 // pred_check_branch
      %61 = sbr.rel (0) target = $region29
    $region28: #{tpu_custom_call.1} parent=1 // pred_region
      %63 = dma.done [#allocation5], 64
    $region29: #{tpu_custom_call.1} parent=1 // pred_fallthru
      _
    %64 = vsyncpa [#allocation4], 1
    %65 = vsyncpa [#allocation5], 1

</llo_original>
